<compile_context>
chip_gen: v5e
topology: v5e:2x2
jax: 0.10.0
libtpu: 0.0.40
codegen_flags: <defaults>
</compile_context>

<pallas_src>
import jax
import jax.numpy as jnp
from jax.experimental import pallas as pl
from jax.experimental.pallas import tpu as pltpu

EPS = 1e-12


def _feature_map_kernel(trow_ref, tcol_ref, v_ref, o_ref):
    # trow_ref: (bt, 1, I_pad)  full text row (I on lanes)  -> in-kernel ||t||
    # tcol_ref: (bt, TI, 1)     text column tile (I on sublanes)
    # v_ref:    (bt, 1, TJ)     image row tile (J on lanes)
    # o_ref:    (bt, TI, TJ)    output tile
    t_row = trow_ref[...]                                            # (bt, 1, I_pad)
    # ||t||_2 per batch element (cross-lane XLU reduce; free slot, store-bound kernel).
    t_norm = jnp.sqrt(jnp.sum(t_row * t_row, axis=-1, keepdims=True))  # (bt, 1, 1)

    v = v_ref[...]                                                   # (bt, 1, TJ)
    # F.normalize over dim=1: denom_j = max(sqrt(sum_i (t_i v_j)^2), eps)
    #                                 = max(|v_j| * ||t||, eps)
    denom = jnp.maximum(jnp.abs(v) * t_norm, EPS)                    # (bt, 1, TJ)
    # Guard ||t|| == 0: reference gives 0, but v/eps may be inf and 0*inf = NaN.
    scaled_v = jnp.where(t_norm > 0.0, v / denom, 0.0)               # (bt, 1, TJ)

    # Outer product with normalization folded in: pure VPU broadcast multiply.
    o_ref[...] = (tcol_ref[...] * scaled_v).astype(o_ref.dtype)      # (bt, TI, TJ)


def _round_up(x, m):
    return ((x + m - 1) // m) * m


def _largest_divisor_tile(padded, unit, cap):
    """Largest multiple of `unit` that divides `padded` and is <= cap."""
    best = unit
    d = unit
    while d <= min(padded, cap):
        if padded % d == 0:
            best = d
        d += unit
    return best


def _num_tensorcores():
    """v7x has 2 TensorCores per chip, v5e/v6e have 1.  Gates the 'keep >=2
    parallel grid steps' rule so single-TC chips don't pay for it needlessly."""
    try:
        info = pltpu.get_tpu_info()
        for attr in ("num_cores", "core_count", "num_tensorcores", "cores_per_chip"):
            v = getattr(info, attr, None)
            if v is not None:
                return int(v)
    except Exception:
        pass
    return 2  # unknown -> assume megacore so both cores get work


def _choose_tiles(B, I_pad, J_pad, target_out_block_bytes=2 << 20,
                  max_ti=256, max_tj=512):
    """Output block ~2 MiB: double-buffered total (out + text-col + text-row +
    image blocks) stays well under the 16 MiB v5e scoped default and far under
    v7x's 64 MiB physical VMEM, while big enough to sit near the HBM roofline."""
    TI = _largest_divisor_tile(I_pad, 8, max_ti)      # sublane axis of output
    TJ = _largest_divisor_tile(J_pad, 128, max_tj)    # lane axis -> dense stores
    per_batch_out = TI * TJ * 4                        # f32
    bt = int(max(1, min(B, target_out_block_bytes // per_batch_out)))
    return bt, TI, TJ


def feature_map_generator(text_embedding, image_embedding):
    """text_embedding: (B, I), image_embedding: (B, J) -> (B, 1, I, J) float32."""
    B, I = text_embedding.shape
    B2, J = image_embedding.shape
    assert B == B2, "batch dims must match"

    # Pad I to a multiple of 8 (sublanes) and J to a multiple of 128 (lanes) so
    # every output store is an unmasked, lane-dense vst.  Zero padding is exact:
    # padded text rows contribute 0 to ||t|| and give 0 output rows; padded image
    # columns give scaled_v = 0; both are sliced off below.
    I_pad = _round_up(I, 8)
    J_pad = _round_up(J, 128)

    t = text_embedding.astype(jnp.float32)
    v = image_embedding.astype(jnp.float32)
    if I_pad != I:
        t = jnp.pad(t, ((0, 0), (0, I_pad - I)))
    if J_pad != J:
        v = jnp.pad(v, ((0, 0), (0, J_pad - J)))

    # Free layout plumbing (reshapes of contiguous arrays, no data movement).
    text_row = t.reshape(B, 1, I_pad)    # I on lanes   -> dense DMA, for ||t||
    text_col = t.reshape(B, I_pad, 1)    # I on sublanes -> column for the multiply
    image_row = v.reshape(B, 1, J_pad)   # J on lanes

    bt, TI, TJ = _choose_tiles(B, I_pad, J_pad)
    ni = I_pad // TI
    nj = J_pad // TJ
    nb = pl.cdiv(B, bt)                  # ragged last batch block is fine

    # If everything fits in one block but B > 1, split the batch so both v7x
    # TensorCores get work on this write-bound kernel (costs ~0.35us on 1-TC chips).
    if nb * ni * nj == 1 and B > 1 and _num_tensorcores() >= 2:
        bt = -(-B // 2)
        nb = pl.cdiv(B, bt)

    grid = (nb, ni, nj)

    out = pl.pallas_call(
        _feature_map_kernel,
        out_shape=jax.ShapeDtypeStruct((B, I_pad, J_pad), jnp.float32),
        grid_spec=pltpu.PrefetchScalarGridSpec(
            num_scalar_prefetch=0,
            grid=grid,
            in_specs=[
                # full-I lane-major text (same block for every i, j -> stays resident)
                pl.BlockSpec((bt, 1, I_pad), lambda b, i, j: (b, 0, 0)),
                # column tile of text for the outer product
                pl.BlockSpec((bt, TI, 1), lambda b, i, j: (b, i, 0)),
                # image row tile
                pl.BlockSpec((bt, 1, TJ), lambda b, i, j: (b, 0, j)),
            ],
            out_specs=pl.BlockSpec((bt, TI, TJ), lambda b, i, j: (b, i, j)),
        ),
        compiler_params=pltpu.CompilerParams(
            # No reduction axis: every output block is written exactly once.
            dimension_semantics=("parallel", "parallel", "parallel"),
            # Explicit scoped-VMEM budget; our live set is <~8 MiB, and 32 MiB is
            # within physical VMEM on v5e/v6e (128 MiB) and v7x (64 MiB per TC).
            vmem_limit_bytes=32 << 20,
        ),
    )(text_row, text_col, image_row)

    # Drop padding and unsqueeze(1): (B, I_pad, J_pad) -> (B, 1, I, J)
    return out[:, None, :I, :J]


def _reference(text_embedding, image_embedding):
    # Pure-JAX reference mirroring the PyTorch semantics (unfactorized).
    outer = jnp.einsum("bi,bj->bij", text_embedding, image_embedding)
    norm = jnp.sqrt(jnp.sum(outer * outer, axis=1, keepdims=True))
    normalized = outer / jnp.maximum(norm, EPS)
    return normalized[:, None, :, :]


if __name__ == "__main__":
    key = jax.random.PRNGKey(0)
    k1, k2 = jax.random.split(key)

    B, I, J = 2, 16, 32
    text = jax.random.normal(k1, (B, I), dtype=jnp.float32)
    image = jax.random.normal(k2, (B, J), dtype=jnp.float32)

    out = feature_map_generator(text, image)
    out = jax.block_until_ready(out)

    ref = _reference(text, image)
    assert out.shape == (B, 1, I, J), out.shape
    assert jnp.allclose(out, ref, atol=1e-5, rtol=1e-5), "mismatch vs reference"

    # Exercise the zero-text-row guard (reference yields 0; kernel must not NaN).
    text_zero = text.at[0].set(0.0)
    out2 = jax.block_until_ready(feature_map_generator(text_zero, image))
    ref2 = _reference(text_zero, image)
    assert jnp.isfinite(out2).all(), "NaN/inf in zero-norm case"
    assert jnp.allclose(out2, ref2, atol=1e-5, rtol=1e-5), "mismatch (zero-norm case)"

    print("KERNEL_OK")
</pallas_src>

<mosaic_0001>
module attributes {stable_mosaic.version = 11 : i64} {
  func.func @_feature_map_kernel(%arg0: i32, %arg1: i32, %arg2: i32, %arg3: memref<1x1x16xf32, #tpu.memory_space<vmem>>, %arg4: memref<1x16x1xf32, #tpu.memory_space<vmem>>, %arg5: memref<1x1x128xf32, #tpu.memory_space<vmem>>, %arg6: memref<1x16x128xf32, #tpu.memory_space<vmem>>) attributes {dimension_semantics = [#tpu.dimension_semantics<parallel>, #tpu.dimension_semantics<parallel>, #tpu.dimension_semantics<parallel>], iteration_bounds = array<i64: 2, 1, 1>, scalar_prefetch = 0 : i64, scratch_operands = 0 : i64, tpu.core_type = #tpu.core_type<tc>, window_params = [{transform_indices = @transform_0, window_bounds = array<i64: 1, 1, 16>}, {transform_indices = @transform_1, window_bounds = array<i64: 1, 16, 1>}, {transform_indices = @transform_2, window_bounds = array<i64: 1, 1, 128>}, {transform_indices = @transform_3, window_bounds = array<i64: 1, 16, 128>}]} {
    %c0 = arith.constant 0 : index
    %c0_0 = arith.constant 0 : index
    %c0_1 = arith.constant 0 : index
    %0 = vector.load %arg3[%c0, %c0_0, %c0_1] : memref<1x1x16xf32, #tpu.memory_space<vmem>>, vector<1x1x16xf32>
    %1 = arith.mulf %0, %0 : vector<1x1x16xf32>
    %cst = arith.constant dense<0.000000e+00> : vector<1x1xf32>
    %2 = vector.multi_reduction <add>, %1, %cst [2] : vector<1x1x16xf32> to vector<1x1xf32>
    %3 = vector.shape_cast %2 : vector<1x1xf32> to vector<1x1x1xf32>
    %4 = math.sqrt %3 : vector<1x1x1xf32>
    %c0_2 = arith.constant 0 : index
    %c0_3 = arith.constant 0 : index
    %c0_4 = arith.constant 0 : index
    %5 = vector.load %arg5[%c0_2, %c0_3, %c0_4] : memref<1x1x128xf32, #tpu.memory_space<vmem>>, vector<1x1x128xf32>
    %6 = math.absf %5 : vector<1x1x128xf32>
    %7 = vector.broadcast %4 : vector<1x1x1xf32> to vector<1x1x128xf32>
    %8 = arith.mulf %6, %7 : vector<1x1x128xf32>
    %cst_5 = arith.constant 9.99999996E-13 : f32
    %9 = vector.broadcast %cst_5 : f32 to vector<1x1x128xf32>
    %10 = arith.maximumf %8, %9 : vector<1x1x128xf32>
    %cst_6 = arith.constant 0.000000e+00 : f32
    %11 = vector.broadcast %cst_6 : f32 to vector<1x1x1xf32>
    %12 = arith.cmpf ogt, %4, %11 : vector<1x1x1xf32>
    %13 = arith.divf %5, %10 : vector<1x1x128xf32>
    %cst_7 = arith.constant 0.000000e+00 : f32
    %14 = vector.shape_cast %12 : vector<1x1x1xi1> to vector<1x1x1xi1>
    %15 = vector.broadcast %14 : vector<1x1x1xi1> to vector<1x1x128xi1>
    %16 = vector.broadcast %cst_7 : f32 to vector<1x1x128xf32>
    %17 = arith.select %15, %13, %16 : vector<1x1x128xi1>, vector<1x1x128xf32>
    %c0_8 = arith.constant 0 : index
    %c0_9 = arith.constant 0 : index
    %c0_10 = arith.constant 0 : index
    %18 = vector.load %arg4[%c0_8, %c0_9, %c0_10] : memref<1x16x1xf32, #tpu.memory_space<vmem>>, vector<1x16x1xf32>
    %19 = vector.broadcast %18 : vector<1x16x1xf32> to vector<1x16x128xf32>
    %20 = vector.broadcast %17 : vector<1x1x128xf32> to vector<1x16x128xf32>
    %21 = arith.mulf %19, %20 : vector<1x16x128xf32>
    %c0_11 = arith.constant 0 : index
    %c0_12 = arith.constant 0 : index
    %c0_13 = arith.constant 0 : index
    %22 = vector.load %arg6[%c0_11, %c0_12, %c0_13] : memref<1x16x128xf32, #tpu.memory_space<vmem>>, vector<1x16x128xf32>
    tpu.vector_store %arg6[%c0_11, %c0_12, %c0_13], %21 {strides = array<i32>} : memref<1x16x128xf32, #tpu.memory_space<vmem>>, vector<1x16x128xf32>,
    return
  }
  func.func @transform_0(%arg0: i32, %arg1: i32, %arg2: i32) -> (i32, i32, i32) {
    %c0_i32 = arith.constant 0 : i32
    %c0_i32_0 = arith.constant 0 : i32
    %c0_i32_1 = arith.constant 0 : i32
    return %arg0, %c0_i32, %c0_i32_0 : i32, i32, i32
  }
  func.func @transform_1(%arg0: i32, %arg1: i32, %arg2: i32) -> (i32, i32, i32) {
    %c0_i32 = arith.constant 0 : i32
    %c0_i32_0 = arith.constant 0 : i32
    return %arg0, %arg1, %c0_i32 : i32, i32, i32
  }
  func.func @transform_2(%arg0: i32, %arg1: i32, %arg2: i32) -> (i32, i32, i32) {
    %c0_i32 = arith.constant 0 : i32
    %c0_i32_0 = arith.constant 0 : i32
    return %arg0, %c0_i32, %arg2 : i32, i32, i32
  }
  func.func @transform_3(%arg0: i32, %arg1: i32, %arg2: i32) -> (i32, i32, i32) {
    %c0_i32 = arith.constant 0 : i32
    return %arg0, %arg1, %arg2 : i32, i32, i32
  }
}

</mosaic_0001>

<llo_original>
// kernel: tpu_custom_call.1
$region0: #{tpu_custom_call.1}
  #allocation0 [shape = 'u32[]', space=smem, size = 0x4, offset = 0x4, fixed_abs, tag = 'smem constant byte address 0x4 - core index']
  #allocation1 [shape = 'u32[72,128]{1,0:T(1,128)}', space=vmem, size = 0x9000, scoped, tag = 'internal scratch']
  %s0 = inlined_call_operand.vmem [shape: f32[2,1,16], index: 0, kind: input, shape index: {}]
  %s1 = inlined_call_operand.vmem [shape: f32[2,16,1], index: 1, kind: input, shape index: {}]
  %s2 = inlined_call_operand.vmem [shape: f32[2,1,128], index: 2, kind: input, shape index: {}]
  %s3 = inlined_call_operand.hbm [shape: f32[2,16,128], index: 3, kind: output, shape index: {}]
  %s4 = sld [smem:[#allocation0]]
  $region45: #{tpu_custom_call.1} parent=0
    _
  %s6 = ssub.s32 1, %s4
  %s7 = scalar_select 0, %s6, %s4
  $region1: #{tpu_custom_call.1} parent=0
    #allocation2 [shape = 'u8[16384]{0}', space=vmem, size = 0x4000, scoped, tag = 'output window, operand 0']
    #allocation3 [shape = 's32[2]{0}', space=sflag, size = 0x8, scoped, tag = 'scoped memory for tpu_custom_call.1']
    %8 = vsyncpa [#allocation3], 0
    %s9 = scalar_lea.sflag [#allocation3], 1
    %10 = vsyncpa %s9, 0
    loop: start=0, step=1, limit=4
    $region2: #{tpu_custom_call.1} parent=1 // loop_pre_header
      _
    $region3: #{tpu_custom_call.1} parent=1 // loop_header
      %s12 = sphi 0, %s16
      %p13 = scmp.ge.s32.totalorder %s12, 4
      %s19 = sphi 0, %s38
      %s20 = sphi 0, %s34
      %s21 = sphi 0, %s30
      %s22 = sphi 0, %s19
      %s23 = sphi 0, %s20
      %s24 = sphi 0, %s21
      %s25 = sphi 0, %s22
      %s26 = sphi 0, %s23
      %s27 = sphi 0, %s24
      %s41 = sphi 0, %s43
      %s44 = sphi 0, %s41
      %s45 = sphi 0, %s44
      %s61 = sphi 0, %s45
      %s69 = sphi 0, %s71
      %s72 = sphi 0, %s69
      %s73 = sphi 0, %s72
      %s89 = sphi 0, %s73
      %s97 = sphi 0, %s99
      %s100 = sphi 0, %s97
      %s101 = sphi 0, %s100
      %s117 = sphi 0, %s101
      %s127 = sphi 0, %s129
      %s130 = sphi 0, %s127
      %s131 = sphi 0, %s130
      %s147 = sphi 0, %s131
    $region4: #{tpu_custom_call.1} parent=1 // loop_header_branch
      %15 = sbr.rel (%p13) target = $region8
    $region5: #{tpu_custom_call.1} parent=1 // loop_body
      %s17 = ssub.s32 %s12, 1
      %s18 = ssub.s32 %s12, 2
      %s28 = sadd.s32 1, %s21
      %p29 = scmp.ge.s32.totalorder %s28, 1
      %s30 = scalar_select %p29, 0, %s28
      %s31 = sadd.s32 1, %s20
      %s32 = scalar_select %p29, %s31, %s20
      %p33 = scmp.ge.s32.totalorder %s32, 1
      %s34 = scalar_select %p33, 0, %s32
      %s35 = sadd.s32 1, %s19
      %s36 = scalar_select %p33, %s35, %s19
      %p37 = scmp.ge.s32.totalorder %s36, 2
      %s38 = scalar_select %p37, 0, %s36
      %s39 = ssub.s32 %s19, %s38
      %p40 = scmp.eq.s32.totalorder %s39, 0
      %s42 = sadd.s32 %s41, 1
      %s43 = scalar_select %p40, %s41, %s42
      %p46 = pneg %p40
      %p47 = scmp.eq.s32.totalorder %s12, 1
      %p48 = por %p46, %p47
      %p49 = scmp.ne.s32.totalorder %s41, %s44
      %p50 = scmp.eq.s32.totalorder %s12, 0
      %p51 = por %p49, %p50
      %p52 = scmp.ne.s32.totalorder %s41, %s44
      %p53 = scmp.eq.s32.totalorder %s17, 1
      %p54 = por %p52, %p53
      %p55 = scmp.ne.s32.totalorder %s44, %s45
      %p56 = scmp.eq.s32.totalorder %s17, 0
      %p57 = por %p55, %p56
      %p58 = scmp.ne.s32.totalorder %s44, %s45
      %p59 = scmp.eq.s32.totalorder %s18, 1
      %p60 = por %p58, %p59
      %p62 = scmp.ne.s32.totalorder %s45, %s61
      %p63 = scmp.eq.s32.totalorder %s18, 0
      %p64 = por %p62, %p63
      %s65 = ssub.s32 %s19, %s38
      %s66 = ssub.s32 %s20, %s34
      %s67 = sor.u32 %s65, %s66
      %p68 = scmp.eq.s32.totalorder %s67, 0
      %s70 = sadd.s32 %s69, 1
      %s71 = scalar_select %p68, %s69, %s70
      %p74 = pneg %p68
      %p75 = scmp.eq.s32.totalorder %s12, 1
      %p76 = por %p74, %p75
      %p77 = scmp.ne.s32.totalorder %s69, %s72
      %p78 = scmp.eq.s32.totalorder %s12, 0
      %p79 = por %p77, %p78
      %p80 = scmp.ne.s32.totalorder %s69, %s72
      %p81 = scmp.eq.s32.totalorder %s17, 1
      %p82 = por %p80, %p81
      %p83 = scmp.ne.s32.totalorder %s72, %s73
      %p84 = scmp.eq.s32.totalorder %s17, 0
      %p85 = por %p83, %p84
      %p86 = scmp.ne.s32.totalorder %s72, %s73
      %p87 = scmp.eq.s32.totalorder %s18, 1
      %p88 = por %p86, %p87
      %p90 = scmp.ne.s32.totalorder %s73, %s89
      %p91 = scmp.eq.s32.totalorder %s18, 0
      %p92 = por %p90, %p91
      %s93 = ssub.s32 %s19, %s38
      %s94 = ssub.s32 %s21, %s30
      %s95 = sor.u32 %s93, %s94
      %p96 = scmp.eq.s32.totalorder %s95, 0
      %s98 = sadd.s32 %s97, 1
      %s99 = scalar_select %p96, %s97, %s98
      %p102 = pneg %p96
      %p103 = scmp.eq.s32.totalorder %s12, 1
      %p104 = por %p102, %p103
      %p105 = scmp.ne.s32.totalorder %s97, %s100
      %p106 = scmp.eq.s32.totalorder %s12, 0
      %p107 = por %p105, %p106
      %p108 = scmp.ne.s32.totalorder %s97, %s100
      %p109 = scmp.eq.s32.totalorder %s17, 1
      %p110 = por %p108, %p109
      %p111 = scmp.ne.s32.totalorder %s100, %s101
      %p112 = scmp.eq.s32.totalorder %s17, 0
      %p113 = por %p111, %p112
      %p114 = scmp.ne.s32.totalorder %s100, %s101
      %p115 = scmp.eq.s32.totalorder %s18, 1
      %p116 = por %p114, %p115
      %p118 = scmp.ne.s32.totalorder %s101, %s117
      %p119 = scmp.eq.s32.totalorder %s18, 0
      %p120 = por %p118, %p119
      %s121 = ssub.s32 %s19, %s38
      %s122 = ssub.s32 %s20, %s34
      %s123 = sor.u32 %s121, %s122
      %s124 = ssub.s32 %s21, %s30
      %s125 = sor.u32 %s123, %s124
      %p126 = scmp.eq.s32.totalorder %s125, 0
      %s128 = sadd.s32 %s127, 1
      %s129 = scalar_select %p126, %s127, %s128
      %p132 = pneg %p126
      %p133 = scmp.eq.s32.totalorder %s12, 1
      %p134 = por %p132, %p133
      %p135 = scmp.ne.s32.totalorder %s127, %s130
      %p136 = scmp.eq.s32.totalorder %s12, 0
      %p137 = por %p135, %p136
      %p138 = scmp.ne.s32.totalorder %s127, %s130
      %p139 = scmp.eq.s32.totalorder %s17, 1
      %p140 = por %p138, %p139
      %p141 = scmp.ne.s32.totalorder %s130, %s131
      %p142 = scmp.eq.s32.totalorder %s17, 0
      %p143 = por %p141, %p142
      %p144 = scmp.ne.s32.totalorder %s130, %s131
      %p145 = scmp.eq.s32.totalorder %s18, 1
      %p146 = por %p144, %p145
      %p148 = scmp.ne.s32.totalorder %s131, %s147
      %p149 = scmp.eq.s32.totalorder %s18, 0
      %p150 = por %p148, %p149
      %p151 = scmp.le.s32.totalorder 1, %s12
      %p152 = scmp.lt.s32.totalorder %s12, 3
      %p153 = pnand %p151, %p152
      %p154 = pneg %p153
      // Predicated region
      $region9: #{tpu_custom_call.1} parent=5 // pred_check
        _
      $region10: #{tpu_custom_call.1} parent=5 // pred_check_branch
        %156 = sbr.rel (%p153) target = $region12
      $region11: #{tpu_custom_call.1} parent=5 // pred_region
        %s157 = ssub.s32 %s12, 1
      $region12: #{tpu_custom_call.1} parent=5 // pred_fallthru
        _
      %p158 = scmp.lt.s32.totalorder %s12, 2
      // Predicated region
      $region13: #{tpu_custom_call.1} parent=5 // pred_check
        %p159 = pneg %p158
      $region14: #{tpu_custom_call.1} parent=5 // pred_check_branch
        %161 = sbr.rel (%p159) target = $region16
      $region15: #{tpu_custom_call.1} parent=5 // pred_region
        // Predicated region
        $region17: #{tpu_custom_call.1} parent=15 // pred_check
          %p162 = pneg %p51
        $region18: #{tpu_custom_call.1} parent=15 // pred_check_branch
          %164 = sbr.rel (%p162) target = $region20
        $region19: #{tpu_custom_call.1} parent=15 // pred_region
          %p165 = scmp.lt.s32.totalorder %s19, 1
          %s166 = scalar_select %p165, %s19, 1
          %s167 = scalar_lea.vmem %s0, %s166
        $region20: #{tpu_custom_call.1} parent=15 // pred_fallthru
          _
        // Predicated region
        $region21: #{tpu_custom_call.1} parent=15 // pred_check
          %p168 = pneg %p79
        $region22: #{tpu_custom_call.1} parent=15 // pred_check_branch
          %170 = sbr.rel (%p168) target = $region24
        $region23: #{tpu_custom_call.1} parent=15 // pred_region
          %s171 = smul.u32 2, %s20
          %p172 = scmp.lt.s32.totalorder %s19, 1
          %s173 = scalar_select %p172, %s19, 1
          %p174 = scmp.lt.s32.totalorder %s171, 1
          %s175 = scalar_select %p174, %s171, 1
          %s176 = smul.addr %s173, 2
          %s177 = sadd.s32 %s175, %s176
          %s178 = smul.addr %s177, 8
          %s179 = scalar_lea.vmem %s1, %s178
          %s180 = smul.u32 2, %s20
        $region24: #{tpu_custom_call.1} parent=15 // pred_fallthru
          _
        // Predicated region
        $region25: #{tpu_custom_call.1} parent=15 // pred_check
          %p181 = pneg %p107
        $region26: #{tpu_custom_call.1} parent=15 // pred_check_branch
          %183 = sbr.rel (%p181) target = $region28
        $region27: #{tpu_custom_call.1} parent=15 // pred_region
          %p184 = scmp.lt.s32.totalorder %s19, 1
          %s185 = scalar_select %p184, %s19, 1
          %p186 = scmp.lt.s32.totalorder %s21, 0
          %s187 = scalar_select %p186, %s21, 0
          %s188 = sadd.s32 %s187, %s185
          %s189 = scalar_lea.vmem %s2, %s188
        $region28: #{tpu_custom_call.1} parent=15 // pred_fallthru
          _
      $region16: #{tpu_custom_call.1} parent=5 // pred_fallthru
        _
      %p190 = scmp.le.s32.totalorder 1, %s12
      %p191 = scmp.lt.s32.totalorder %s12, 3
      %p192 = pnand %p190, %p191
      %p193 = pneg %p192
      // Predicated region
      $region29: #{tpu_custom_call.1} parent=5 // pred_check
        _
      $region30: #{tpu_custom_call.1} parent=5 // pred_check_branch
        %195 = sbr.rel (%p192) target = $region32
      $region31: #{tpu_custom_call.1} parent=5 // pred_region
        %s196 = ssub.s32 %s12, 1
        %p197 = scmp.lt.s32.totalorder %s22, 1
        %s198 = scalar_select %p197, %s22, 1
        %s199 = scalar_lea.vmem %s0, %s198
        %p200 = pneg %p57
        %p201 = pneg %p54
        %s202 = smul.u32 2, %s23
        %p203 = scmp.lt.s32.totalorder %s22, 1
        %s204 = scalar_select %p203, %s22, 1
        %p205 = scmp.lt.s32.totalorder %s202, 1
        %s206 = scalar_select %p205, %s202, 1
        %s207 = smul.addr %s204, 2
        %s208 = sadd.s32 %s206, %s207
        %s209 = smul.addr %s208, 8
        %s210 = scalar_lea.vmem %s1, %s209
        %p211 = pneg %p85
        %p212 = pneg %p82
        %p213 = scmp.lt.s32.totalorder %s22, 1
        %s214 = scalar_select %p213, %s22, 1
        %p215 = scmp.lt.s32.totalorder %s24, 0
        %s216 = scalar_select %p215, %s24, 0
        %s217 = sadd.s32 %s216, %s214
        %s218 = scalar_lea.vmem %s2, %s217
        %p219 = pneg %p113
        %p220 = pneg %p110
        %p221 = pneg %p143
        %p222 = pneg %p140
        %s223 = sand.u32 %s130, 1
        %s224 = scalar_lea.sflag [#allocation3], %s223
        %s225 = sand.u32 %s130, 1
        %s226 = smul.addr %s225, 16
        %s227 = scalar_lea.vmem [#allocation2], %s226
        %p228 = scmp.lt.s32.totalorder %s22, 1
        %s229 = scalar_select %p228, %s22, 1
        %s230 = scalar_lea.vmem %s0, %s229
        %s231 = smul.u32 2, %s23
        %p232 = scmp.lt.s32.totalorder %s22, 1
        %s233 = scalar_select %p232, %s22, 1
        %p234 = scmp.lt.s32.totalorder %s231, 1
        %s235 = scalar_select %p234, %s231, 1
        %s236 = smul.addr %s233, 2
        %s237 = sadd.s32 %s235, %s236
        %s238 = smul.addr %s237, 8
        %s239 = scalar_lea.vmem %s1, %s238
        %s240 = smul.u32 2, %s23
        %p241 = scmp.lt.s32.totalorder %s22, 1
        %s242 = scalar_select %p241, %s22, 1
        %p243 = scmp.lt.s32.totalorder %s24, 0
        %s244 = scalar_select %p243, %s24, 0
        %s245 = sadd.s32 %s244, %s242
        %s246 = scalar_lea.vmem %s2, %s245
        %s247 = smul.u32 2, %s23
        %v248 = vld [vmem:[%s230] sm:$0x1]
        %v249 = vmul.f32 %v248, %v248
        %vm250 = vcmask 122880
        %v251 = vsel %vm250, %v249, 0.0
        %252 = vadd.xlane.f32.xlu0 %v251
        %v253 = vpop.xlane.xlu0 %252
        %v254 = vrsqrt.pop %v253
        %v255 = vmul.f32 %v254, %v253
        %v256 = vmul.f32 %v255, %v254
        %v257 = vmul.f32 0.5, %v256
        %v258 = vsub.f32 1.5, %v257
        %v259 = vmul.f32 %v254, %v258
        %v260 = vmul.f32 %v253, %v259
        %vm261 = vcmp.eq.f32.partialorder %v253, inf
        %v262 = vsel %vm261, %v253, %v260
        %vm263 = vcmp.eq.f32.partialorder %v253, 0.0
        %v264 = vand.u32 %v253, 2147483648
        %v265 = vsel %vm263, %v264, %v262
        %v266 = vld [vmem:[%s246] sm:$0x1]
        %v267 = vand.u32 2147483647, %v266
        %v268 = vmul.f32 %v267, %v265
        %v269 = vmax.f32 %v268, 1e-12
        %vm270 = vcmp.gt.f32.partialorder %v265, 0.0
        %v271 = vrcp.pop %v269
        %v272 = vmul.f32 %v269, %v271
        %v273 = vsub.f32 1.0, %v272
        %v274 = vmul.f32 %v271, %v273
        %v275 = vadd.f32 %v271, %v274
        %vm276 = vweird.f32 %v269
        %vm277 = vweird.f32 %v271
        %vm278 = vmor %vm276, %vm277
        %v279 = vsel %vm278, %v271, %v275
        %v280 = vand.u32 2147483647, %v269
        %vm281 = vcmp.eq.f32.partialorder %v280, 8.507059e+37
        %v282 = vand.u32 %v269, 2147483648
        %v283 = vor.u32 1.1754944e-38, %v282
        %v284 = vsel %vm281, %v283, %v279
        %v285 = vmul.f32 %v266, %v284
        %v286 = vsel %vm270, 1, 0
        %vm287 = vcmp.eq.s32.totalorder %v286, 1
        %v288 = vsel %vm287, %v285, 0.0
        %v289 = vld [vmem:[%s239] sm:$0xff]
        %v290 = vld [vmem:[%s239 + $0x8] sm:$0xff]
        %292 = vset.pattern.permute.xlu0 0
        %293 = vperm.xlu0 %292, %v289
        %v294 = vpop.permute.xlu0 %293
        %297 = vset.pattern.permute.xlu0 0
        %298 = vperm.xlu0 %297, %v290
        %v299 = vpop.permute.xlu0 %298
        %v301 = vperm.slane %v288, 0
        %v302 = vmul.f32 %v294, %v301
        %v303 = vmul.f32 %v299, %v301
        %304 = vst [vmem:[%s227] sm:$0xff] %v302
        %305 = vst [vmem:[%s227 + $0x8] sm:$0xff] %v303
        %s306 = sand.u32 %s130, 1
        %s307 = scalar_lea.sflag [#allocation3], %s306
        %s308 = sand.u32 %s130, 1
        %s309 = smul.addr %s308, 16
        %s310 = scalar_lea.vmem [#allocation2], %s309
        // Predicated region
        $region33: #{tpu_custom_call.1} parent=31 // pred_check
          %p311 = pneg %p140
        $region34: #{tpu_custom_call.1} parent=31 // pred_check_branch
          %313 = sbr.rel (%p311) target = $region36
        $region35: #{tpu_custom_call.1} parent=31 // pred_region
          %s314 = smul.u32 2, %s23
          %316 = vsyncadd %s307, 0
          %s317 = sadd.s32 %s24, %s314
          %s318 = smul.addr %s22, 2
          %s319 = sadd.s32 %s317, %s318
          %s320 = smul.addr %s319, 8
          %s321 = scalar_lea.hbm %s3, %s320
          %s322 = sshll.u32 %s310, 4
          %s323 = int_to_ptr.vmem [resolvable:$true] %s322
          %s324 = sshll.u32 %s321, 4
          %s325 = int_to_ptr.hbm [resolvable:$true] %s324
          %330 = dma.vmem_to_hbm [thread:$0]  %s323, 256, %s325, %s307, 128, 128, 8
        $region36: #{tpu_custom_call.1} parent=31 // pred_fallthru
          _
      $region32: #{tpu_custom_call.1} parent=5 // pred_fallthru
        _
      %p331 = scmp.le.s32.totalorder 2, %s12
      // Predicated region
      $region37: #{tpu_custom_call.1} parent=5 // pred_check
        %p332 = pneg %p331
      $region38: #{tpu_custom_call.1} parent=5 // pred_check_branch
        %334 = sbr.rel (%p332) target = $region40
      $region39: #{tpu_custom_call.1} parent=5 // pred_region
        %s335 = ssub.s32 %s12, 2
        // Predicated region
        $region41: #{tpu_custom_call.1} parent=39 // pred_check
          %p336 = pneg %p146
        $region42: #{tpu_custom_call.1} parent=39 // pred_check_branch
          %338 = sbr.rel (%p336) target = $region44
        $region43: #{tpu_custom_call.1} parent=39 // pred_region
          %s339 = sand.u32 %s131, 1
          %s340 = scalar_lea.sflag [#allocation3], %s339
          %s341 = sand.u32 %s131, 1
          %s342 = smul.addr %s341, 16
          %s343 = scalar_lea.vmem [#allocation2], %s342
          %345 = dma.done %s340, 256
        $region44: #{tpu_custom_call.1} parent=39 // pred_fallthru
          _
      $region40: #{tpu_custom_call.1} parent=5 // pred_fallthru
        _
    $region6: #{tpu_custom_call.1} parent=1 // loop_footer
      %s16 = sadd.s32 1, %s12
    $region7: #{tpu_custom_call.1} parent=1 // loop_footer_branch
      %11 = sbr.rel target = $region3
    $region8: #{tpu_custom_call.1} parent=1 // loop_exit
      _
    %346 = vsyncpa [#allocation3], 1
    %s347 = scalar_lea.sflag [#allocation3], 1
    %348 = vsyncpa %s347, 1

</llo_original>
